<compile_context>
chip_gen: v5e
topology: v5e:2x2
jax: 0.10.0
libtpu: 0.0.40
codegen_flags: <defaults>
</compile_context>

<pallas_src>
import jax
import jax.numpy as jnp
from jax.experimental import pallas as pl
from jax.experimental.pallas import tpu as pltpu


def _round_up(n, m):
    return ((n + m - 1) // m) * m


def critic_kernel(scal_ref, x0_ref, x1_ref, w1t_ref, w2t_ref, w3r_ref, out_ref):
    # scal_ref: SMEM f32[4] = [conv_w0, conv_w1, conv_b, out_b]
    cw0 = scal_ref[0]
    cw1 = scal_ref[1]
    cb = scal_ref[2]
    b3 = scal_ref[3]

    # Conv1d(2,1,1) + Flatten as a VPU FMA -> (Bt, N)
    y = cw0 * x0_ref[...] + cw1 * x1_ref[...] + cb

    # Linear(num_inputs, H1p, bias=False) + ReLU : (Bt,N)@(N,H1p) on the MXU
    h1 = jnp.maximum(
        jnp.dot(y, w1t_ref[...], preferred_element_type=jnp.float32), 0.0)

    # Linear(H1p, H2p, bias=False) + ReLU : (Bt,H1p)@(H1p,H2p) on the MXU
    h2 = jnp.maximum(
        jnp.dot(h1, w2t_ref[...], preferred_element_type=jnp.float32), 0.0)

    # Linear(hidden2, 1) + bias as VPU mul + lane reduce (XLU) -> (Bt, 1)
    out_ref[...] = jnp.sum(h2 * w3r_ref[...], axis=-1, keepdims=True) + b3


def init_params(key, num_inputs, hidden1, hidden2):
    """PyTorch-layout parameters (exactly what the nn.Module would hold)."""
    ks = jax.random.split(key, 6)

    def u(k, shape, fan_in):
        bound = 1.0 / jnp.sqrt(jnp.float32(fan_in))
        return jax.random.uniform(k, shape, jnp.float32, -bound, bound)

    cw = u(ks[0], (1, 2), 2)                          # Conv1d weight (1,2,1) squeezed
    cb = u(ks[1], (1,), 2)                            # Conv1d bias
    w1 = u(ks[2], (hidden1, num_inputs), num_inputs)  # Linear weights, torch layout
    w2 = u(ks[3], (hidden2, hidden1), hidden1)
    w3 = u(ks[4], (1, hidden2), hidden2)
    b3 = u(ks[5], (1,), hidden2)
    return cw, cb, w1, w2, w3, b3


def prepare_params(params):
    """One-time layout plumbing (do this at init, NOT per forward call):
    transpose Linear weights to (in, out), zero-pad hidden dims to multiples of
    128 for lane-dense tiles, and pack the 4 scalars for SMEM."""
    cw, cb, w1, w2, w3, b3 = params
    hidden1, num_inputs = w1.shape
    hidden2 = w2.shape[0]
    h1p = _round_up(hidden1, 128)
    h2p = _round_up(hidden2, 128)

    w1t = jnp.zeros((num_inputs, h1p), jnp.float32).at[:, :hidden1].set(w1.T)
    w2t = jnp.zeros((h1p, h2p), jnp.float32).at[:hidden1, :hidden2].set(w2.T)
    w3r = jnp.zeros((1, h2p), jnp.float32).at[:, :hidden2].set(w3)
    scal = jnp.array([cw[0, 0], cw[0, 1], cb[0], b3[0]], jnp.float32)
    return scal, w1t, w2t, w3r


def _batch_tile(batch):
    if batch % 128 == 0:
        return 128
    if batch % 8 == 0:
        return 8
    return batch  # single full-array tile (covers the whole batch dim)


@jax.jit
def critic_forward_batched(x, scal, w1t, w2t, w3r):
    """x: (B, num_inputs, 2) float32 -> (B, 1); one CriticNet forward per row."""
    batch, num_inputs, _ = x.shape
    h1p = w1t.shape[1]
    h2p = w2t.shape[1]

    # Layout plumbing only: split interleaved (x[n,0], x[n,1]) pairs into two
    # lane-dense (B, N) planes (keeps the size-2 axis off the lane dimension).
    x = x.astype(jnp.float32)
    x0 = x[:, :, 0]
    x1 = x[:, :, 1]

    bt = _batch_tile(batch)
    grid = (batch // bt,)

    out = pl.pallas_call(
        critic_kernel,
        out_shape=jax.ShapeDtypeStruct((batch, 1), jnp.float32),
        grid=grid,
        in_specs=[
            pl.BlockSpec(memory_space=pltpu.MemorySpace.SMEM),      # scalars
            pl.BlockSpec((bt, num_inputs), lambda i: (i, 0)),       # x channel 0
            pl.BlockSpec((bt, num_inputs), lambda i: (i, 0)),       # x channel 1
            pl.BlockSpec((num_inputs, h1p), lambda i: (0, 0)),      # w1t (resident)
            pl.BlockSpec((h1p, h2p), lambda i: (0, 0)),             # w2t (resident)
            pl.BlockSpec((1, h2p), lambda i: (0, 0)),               # w3 row (resident)
        ],
        out_specs=pl.BlockSpec((bt, 1), lambda i: (i, 0)),
        compiler_params=pltpu.CompilerParams(
            dimension_semantics=("parallel",)),  # shard batch tiles across TCs (v7x)
    )(scal, x0, x1, w1t, w2t, w3r)
    return out


def critic_forward(x, prepped):
    """Single-sample forward matching the PyTorch module: x (num_inputs, 2) -> (1,)."""
    out = critic_forward_batched(x[None, ...], *prepped)
    return out.reshape(1)


def reference_forward(x, params):
    """Pure-JAX reference mirroring the PyTorch module (single sample)."""
    cw, cb, w1, w2, w3, b3 = params
    xr = x.reshape(-1, 2)                                   # (N, 2) pairs
    conv = xr[:, 0] * cw[0, 0] + xr[:, 1] * cw[0, 1] + cb[0]  # (N,)
    h1 = jnp.maximum(w1 @ conv, 0.0)
    h2 = jnp.maximum(w2 @ h1, 0.0)
    return w3 @ h2 + b3                                     # (1,)


if __name__ == "__main__":
    num_inputs, hidden1, hidden2 = 128, 64, 32
    batch = 16

    key = jax.random.PRNGKey(0)
    kx, kp = jax.random.split(key)
    params = init_params(kp, num_inputs, hidden1, hidden2)
    prepped = prepare_params(params)  # one-time layout plumbing

    # Batched path (B samples, each the same CriticNet forward).
    xb = jax.random.normal(kx, (batch, num_inputs, 2), jnp.float32)
    out_b = jax.block_until_ready(critic_forward_batched(xb, *prepped))
    ref_b = jax.vmap(lambda xi: reference_forward(xi, params))(xb)  # (B, 1)
    assert out_b.shape == (batch, 1)
    assert jnp.allclose(out_b, ref_b, atol=1e-4, rtol=1e-4), (out_b, ref_b)

    # Single-sample path (exact PyTorch module semantics: returns shape (1,)).
    xs = xb[0]
    out_s = jax.block_until_ready(critic_forward(xs, prepped))
    ref_s = reference_forward(xs, params)
    assert out_s.shape == (1,)
    assert jnp.allclose(out_s, ref_s, atol=1e-4, rtol=1e-4), (out_s, ref_s)

    print("KERNEL_OK")
</pallas_src>

<mosaic_0001>
module attributes {stable_mosaic.version = 11 : i64} {
  func.func @critic_kernel(%arg0: i32, %arg1: memref<4xf32, #tpu.memory_space<smem>>, %arg2: memref<8x128xf32, #tpu.memory_space<vmem>>, %arg3: memref<8x128xf32, #tpu.memory_space<vmem>>, %arg4: memref<128x128xf32, #tpu.memory_space<vmem>>, %arg5: memref<128x128xf32, #tpu.memory_space<vmem>>, %arg6: memref<1x128xf32, #tpu.memory_space<vmem>>, %arg7: memref<8x1xf32, #tpu.memory_space<vmem>>) attributes {dimension_semantics = [#tpu.dimension_semantics<parallel>], iteration_bounds = array<i64: 2>, scalar_prefetch = 0 : i64, scratch_operands = 0 : i64, tpu.core_type = #tpu.core_type<tc>, window_params = [{transform_indices = @transform_0, window_bounds = array<i64: 4>}, {transform_indices = @transform_1, window_bounds = array<i64: 8, 128>}, {transform_indices = @transform_2, window_bounds = array<i64: 8, 128>}, {pipeline_mode = #tpu.pipeline_mode<synchronous>, transform_indices = @transform_3, window_bounds = array<i64: 128, 128>}, {pipeline_mode = #tpu.pipeline_mode<synchronous>, transform_indices = @transform_4, window_bounds = array<i64: 128, 128>}, {pipeline_mode = #tpu.pipeline_mode<synchronous>, transform_indices = @transform_5, window_bounds = array<i64: 1, 128>}, {transform_indices = @transform_6, window_bounds = array<i64: 8, 1>}]} {
    %c0 = arith.constant 0 : index
    %0 = memref.load %arg1[%c0] : memref<4xf32, #tpu.memory_space<smem>>
    %c1 = arith.constant 1 : index
    %1 = memref.load %arg1[%c1] : memref<4xf32, #tpu.memory_space<smem>>
    %c2 = arith.constant 2 : index
    %2 = memref.load %arg1[%c2] : memref<4xf32, #tpu.memory_space<smem>>
    %c3 = arith.constant 3 : index
    %3 = memref.load %arg1[%c3] : memref<4xf32, #tpu.memory_space<smem>>
    %c0_0 = arith.constant 0 : index
    %c0_1 = arith.constant 0 : index
    %4 = vector.load %arg2[%c0_0, %c0_1] : memref<8x128xf32, #tpu.memory_space<vmem>>, vector<8x128xf32>
    %5 = vector.broadcast %0 : f32 to vector<8x128xf32>
    %6 = arith.mulf %5, %4 : vector<8x128xf32>
    %c0_2 = arith.constant 0 : index
    %c0_3 = arith.constant 0 : index
    %7 = vector.load %arg3[%c0_2, %c0_3] : memref<8x128xf32, #tpu.memory_space<vmem>>, vector<8x128xf32>
    %8 = vector.broadcast %1 : f32 to vector<8x128xf32>
    %9 = arith.mulf %8, %7 : vector<8x128xf32>
    %10 = arith.addf %6, %9 : vector<8x128xf32>
    %11 = vector.broadcast %2 : f32 to vector<8x128xf32>
    %12 = arith.addf %10, %11 : vector<8x128xf32>
    %c0_4 = arith.constant 0 : index
    %c0_5 = arith.constant 0 : index
    %13 = vector.load %arg4[%c0_4, %c0_5] : memref<128x128xf32, #tpu.memory_space<vmem>>, vector<128x128xf32>
    %cst = arith.constant dense<0.000000e+00> : vector<8x128xf32>
    %14 = tpu.matmul %12, %13, %cst {dimension_numbers = #tpu.dot_dimension_numbers<[1], [0], [0], [1], [0, 0, 1, 1], [], []>} : vector<8x128xf32>, vector<128x128xf32>, vector<8x128xf32> -> vector<8x128xf32>
    %cst_6 = arith.constant 0.000000e+00 : f32
    %15 = vector.broadcast %cst_6 : f32 to vector<8x128xf32>
    %16 = arith.maximumf %14, %15 : vector<8x128xf32>
    %c0_7 = arith.constant 0 : index
    %c0_8 = arith.constant 0 : index
    %17 = vector.load %arg5[%c0_7, %c0_8] : memref<128x128xf32, #tpu.memory_space<vmem>>, vector<128x128xf32>
    %cst_9 = arith.constant dense<0.000000e+00> : vector<8x128xf32>
    %18 = tpu.matmul %16, %17, %cst_9 {dimension_numbers = #tpu.dot_dimension_numbers<[1], [0], [0], [1], [0, 0, 1, 1], [], []>} : vector<8x128xf32>, vector<128x128xf32>, vector<8x128xf32> -> vector<8x128xf32>
    %cst_10 = arith.constant 0.000000e+00 : f32
    %19 = vector.broadcast %cst_10 : f32 to vector<8x128xf32>
    %20 = arith.maximumf %18, %19 : vector<8x128xf32>
    %c0_11 = arith.constant 0 : index
    %c0_12 = arith.constant 0 : index
    %21 = vector.load %arg6[%c0_11, %c0_12] : memref<1x128xf32, #tpu.memory_space<vmem>>, vector<1x128xf32>
    %22 = vector.broadcast %21 : vector<1x128xf32> to vector<8x128xf32>
    %23 = arith.mulf %20, %22 : vector<8x128xf32>
    %cst_13 = arith.constant dense<0.000000e+00> : vector<8xf32>
    %24 = vector.multi_reduction <add>, %23, %cst_13 [1] : vector<8x128xf32> to vector<8xf32>
    %25 = vector.shape_cast %24 : vector<8xf32> to vector<8x1xf32>
    %26 = vector.broadcast %3 : f32 to vector<8x1xf32>
    %27 = arith.addf %25, %26 : vector<8x1xf32>
    %c0_14 = arith.constant 0 : index
    %c0_15 = arith.constant 0 : index
    %28 = vector.load %arg7[%c0_14, %c0_15] : memref<8x1xf32, #tpu.memory_space<vmem>>, vector<8x1xf32>
    tpu.vector_store %arg7[%c0_14, %c0_15], %27 {strides = array<i32>} : memref<8x1xf32, #tpu.memory_space<vmem>>, vector<8x1xf32>,
    return
  }
  func.func @transform_0(%arg0: i32) -> i32 {
    %c0_i32 = arith.constant 0 : i32
    %c0_i32_0 = arith.constant 0 : i32
    return %c0_i32 : i32
  }
  func.func @transform_1(%arg0: i32) -> (i32, i32) {
    %c0_i32 = arith.constant 0 : i32
    %c0_i32_0 = arith.constant 0 : i32
    return %arg0, %c0_i32 : i32, i32
  }
  func.func @transform_2(%arg0: i32) -> (i32, i32) {
    %c0_i32 = arith.constant 0 : i32
    %c0_i32_0 = arith.constant 0 : i32
    return %arg0, %c0_i32 : i32, i32
  }
  func.func @transform_3(%arg0: i32) -> (i32, i32) {
    %c0_i32 = arith.constant 0 : i32
    %c0_i32_0 = arith.constant 0 : i32
    %c0_i32_1 = arith.constant 0 : i32
    return %c0_i32, %c0_i32_0 : i32, i32
  }
  func.func @transform_4(%arg0: i32) -> (i32, i32) {
    %c0_i32 = arith.constant 0 : i32
    %c0_i32_0 = arith.constant 0 : i32
    %c0_i32_1 = arith.constant 0 : i32
    return %c0_i32, %c0_i32_0 : i32, i32
  }
  func.func @transform_5(%arg0: i32) -> (i32, i32) {
    %c0_i32 = arith.constant 0 : i32
    %c0_i32_0 = arith.constant 0 : i32
    %c0_i32_1 = arith.constant 0 : i32
    return %c0_i32, %c0_i32_0 : i32, i32
  }
  func.func @transform_6(%arg0: i32) -> (i32, i32) {
    %c0_i32 = arith.constant 0 : i32
    %c0_i32_0 = arith.constant 0 : i32
    return %arg0, %c0_i32 : i32, i32
  }
}

</mosaic_0001>

<llo_original>
// kernel: critic_forward_batched.1
$region0: #{critic_forward_batched.1}
  #allocation0 [shape = 'u32[]', space=smem, size = 0x4, offset = 0x4, fixed_abs, tag = 'smem constant byte address 0x4 - core index']
  #allocation1 [shape = 'u32[72,128]{1,0:T(1,128)}', space=vmem, size = 0x9000, scoped, tag = 'internal scratch']
  %s0 = inlined_call_operand.vmem [shape: f32[4], index: 0, kind: input, shape index: {}]
  %s1 = inlined_call_operand.vmem [shape: f32[16,128], index: 1, kind: input, shape index: {}]
  %s2 = inlined_call_operand.vmem [shape: f32[16,128], index: 2, kind: input, shape index: {}]
  %s3 = inlined_call_operand.vmem [shape: f32[128,128], index: 3, kind: input, shape index: {}]
  %s4 = inlined_call_operand.hbm [shape: f32[128,128], index: 4, kind: input, shape index: {}]
  %s5 = inlined_call_operand.vmem [shape: f32[1,128], index: 5, kind: input, shape index: {}]
  %s6 = inlined_call_operand.vmem [shape: f32[16,1], index: 6, kind: output, shape index: {}]
  %s7 = sld [smem:[#allocation0]]
  $region65: #{critic_forward_batched.1} parent=0
    _
  %s9 = ssub.s32 1, %s7
  %s10 = scalar_select 0, %s9, %s7
  $region1: #{critic_forward_batched.1} parent=0
    #allocation2 [shape = 'u8[512]{0}', space=smem, size = 0x200, scoped, tag = 'input window, operand 0, single buffered']
    #allocation3 [shape = 's32[2]{0}', space=sflag, size = 0x8, scoped, tag = 'scoped memory for critic_forward_batched.1']
    #allocation4 [shape = 's32[2]{0}', space=sflag, size = 0x8, scoped, tag = 'scoped memory for critic_forward_batched.1']
    #allocation5 [shape = 'u8[65536]{0}', space=vmem, size = 0x10000, scoped, tag = 'input window, operand 4, single buffered']
    %11 = vsyncpa [#allocation4], 0
    %12 = vsyncpa [#allocation3], 0
    loop: start=0, step=1, limit=4
    $region2: #{critic_forward_batched.1} parent=1 // loop_pre_header
      _
    $region3: #{critic_forward_batched.1} parent=1 // loop_header
      %s14 = sphi 0, %s18
      %p15 = scmp.ge.s32.totalorder %s14, 4
      %s22 = sphi 0, %s22
      %s24 = sphi 0, %s22
      %s25 = sphi 0, %s24
      %s39 = sphi 0, %s25
      %s45 = sphi 0, %s47
      %s48 = sphi 0, %s45
      %s49 = sphi 0, %s48
      %s65 = sphi 0, %s49
      %s71 = sphi 0, %s73
      %s74 = sphi 0, %s71
      %s75 = sphi 0, %s74
      %s91 = sphi 0, %s75
      %s95 = sphi 0, %s95
      %s97 = sphi 0, %s95
      %s98 = sphi 0, %s97
      %s112 = sphi 0, %s98
      %s116 = sphi 0, %s116
      %s118 = sphi 0, %s116
      %s119 = sphi 0, %s118
      %s133 = sphi 0, %s119
      %s137 = sphi 0, %s137
      %s139 = sphi 0, %s137
      %s140 = sphi 0, %s139
      %s154 = sphi 0, %s140
      %s160 = sphi 0, %s162
      %s163 = sphi 0, %s160
      %s164 = sphi 0, %s163
      %s180 = sphi 0, %s164
    $region4: #{critic_forward_batched.1} parent=1 // loop_header_branch
      %17 = sbr.rel (%p15) target = $region8
    $region5: #{critic_forward_batched.1} parent=1 // loop_body
      %s19 = ssub.s32 %s14, 1
      %s20 = ssub.s32 %s14, 2
      %s21 = sadd.s32 %s14, 1
      %s23 = sadd.s32 %s22, 1
      %p26 = scmp.eq.s32.totalorder %s14, 1
      %p27 = scmp.ne.s32.totalorder %s22, %s24
      %p28 = scmp.eq.s32.totalorder %s14, 0
      %p29 = por %p27, %p28
      %p30 = scmp.ne.s32.totalorder %s22, %s24
      %p31 = scmp.eq.s32.totalorder %s19, 1
      %p32 = por %p30, %p31
      %p33 = scmp.ne.s32.totalorder %s24, %s25
      %p34 = scmp.eq.s32.totalorder %s19, 0
      %p35 = por %p33, %p34
      %p36 = scmp.ne.s32.totalorder %s24, %s25
      %p37 = scmp.eq.s32.totalorder %s20, 1
      %p38 = por %p36, %p37
      %p40 = scmp.ne.s32.totalorder %s25, %s39
      %p41 = scmp.eq.s32.totalorder %s20, 0
      %p42 = por %p40, %p41
      %s43 = ssub.s32 %s14, %s21
      %p44 = scmp.eq.s32.totalorder %s43, 0
      %s46 = sadd.s32 %s45, 1
      %s47 = scalar_select %p44, %s45, %s46
      %p50 = pneg %p44
      %p51 = scmp.eq.s32.totalorder %s14, 1
      %p52 = por %p50, %p51
      %p53 = scmp.ne.s32.totalorder %s45, %s48
      %p54 = scmp.eq.s32.totalorder %s14, 0
      %p55 = por %p53, %p54
      %p56 = scmp.ne.s32.totalorder %s45, %s48
      %p57 = scmp.eq.s32.totalorder %s19, 1
      %p58 = por %p56, %p57
      %p59 = scmp.ne.s32.totalorder %s48, %s49
      %p60 = scmp.eq.s32.totalorder %s19, 0
      %p61 = por %p59, %p60
      %p62 = scmp.ne.s32.totalorder %s48, %s49
      %p63 = scmp.eq.s32.totalorder %s20, 1
      %p64 = por %p62, %p63
      %p66 = scmp.ne.s32.totalorder %s49, %s65
      %p67 = scmp.eq.s32.totalorder %s20, 0
      %p68 = por %p66, %p67
      %s69 = ssub.s32 %s14, %s21
      %p70 = scmp.eq.s32.totalorder %s69, 0
      %s72 = sadd.s32 %s71, 1
      %s73 = scalar_select %p70, %s71, %s72
      %p76 = pneg %p70
      %p77 = scmp.eq.s32.totalorder %s14, 1
      %p78 = por %p76, %p77
      %p79 = scmp.ne.s32.totalorder %s71, %s74
      %p80 = scmp.eq.s32.totalorder %s14, 0
      %p81 = por %p79, %p80
      %p82 = scmp.ne.s32.totalorder %s71, %s74
      %p83 = scmp.eq.s32.totalorder %s19, 1
      %p84 = por %p82, %p83
      %p85 = scmp.ne.s32.totalorder %s74, %s75
      %p86 = scmp.eq.s32.totalorder %s19, 0
      %p87 = por %p85, %p86
      %p88 = scmp.ne.s32.totalorder %s74, %s75
      %p89 = scmp.eq.s32.totalorder %s20, 1
      %p90 = por %p88, %p89
      %p92 = scmp.ne.s32.totalorder %s75, %s91
      %p93 = scmp.eq.s32.totalorder %s20, 0
      %p94 = por %p92, %p93
      %s96 = sadd.s32 %s95, 1
      %p99 = scmp.eq.s32.totalorder %s14, 1
      %p100 = scmp.ne.s32.totalorder %s95, %s97
      %p101 = scmp.eq.s32.totalorder %s14, 0
      %p102 = por %p100, %p101
      %p103 = scmp.ne.s32.totalorder %s95, %s97
      %p104 = scmp.eq.s32.totalorder %s19, 1
      %p105 = por %p103, %p104
      %p106 = scmp.ne.s32.totalorder %s97, %s98
      %p107 = scmp.eq.s32.totalorder %s19, 0
      %p108 = por %p106, %p107
      %p109 = scmp.ne.s32.totalorder %s97, %s98
      %p110 = scmp.eq.s32.totalorder %s20, 1
      %p111 = por %p109, %p110
      %p113 = scmp.ne.s32.totalorder %s98, %s112
      %p114 = scmp.eq.s32.totalorder %s20, 0
      %p115 = por %p113, %p114
      %s117 = sadd.s32 %s116, 1
      %p120 = scmp.eq.s32.totalorder %s14, 1
      %p121 = scmp.ne.s32.totalorder %s116, %s118
      %p122 = scmp.eq.s32.totalorder %s14, 0
      %p123 = por %p121, %p122
      %p124 = scmp.ne.s32.totalorder %s116, %s118
      %p125 = scmp.eq.s32.totalorder %s19, 1
      %p126 = por %p124, %p125
      %p127 = scmp.ne.s32.totalorder %s118, %s119
      %p128 = scmp.eq.s32.totalorder %s19, 0
      %p129 = por %p127, %p128
      %p130 = scmp.ne.s32.totalorder %s118, %s119
      %p131 = scmp.eq.s32.totalorder %s20, 1
      %p132 = por %p130, %p131
      %p134 = scmp.ne.s32.totalorder %s119, %s133
      %p135 = scmp.eq.s32.totalorder %s20, 0
      %p136 = por %p134, %p135
      %s138 = sadd.s32 %s137, 1
      %p141 = scmp.eq.s32.totalorder %s14, 1
      %p142 = scmp.ne.s32.totalorder %s137, %s139
      %p143 = scmp.eq.s32.totalorder %s14, 0
      %p144 = por %p142, %p143
      %p145 = scmp.ne.s32.totalorder %s137, %s139
      %p146 = scmp.eq.s32.totalorder %s19, 1
      %p147 = por %p145, %p146
      %p148 = scmp.ne.s32.totalorder %s139, %s140
      %p149 = scmp.eq.s32.totalorder %s19, 0
      %p150 = por %p148, %p149
      %p151 = scmp.ne.s32.totalorder %s139, %s140
      %p152 = scmp.eq.s32.totalorder %s20, 1
      %p153 = por %p151, %p152
      %p155 = scmp.ne.s32.totalorder %s140, %s154
      %p156 = scmp.eq.s32.totalorder %s20, 0
      %p157 = por %p155, %p156
      %s158 = ssub.s32 %s14, %s21
      %p159 = scmp.eq.s32.totalorder %s158, 0
      %s161 = sadd.s32 %s160, 1
      %s162 = scalar_select %p159, %s160, %s161
      %p165 = pneg %p159
      %p166 = scmp.eq.s32.totalorder %s14, 1
      %p167 = por %p165, %p166
      %p168 = scmp.ne.s32.totalorder %s160, %s163
      %p169 = scmp.eq.s32.totalorder %s14, 0
      %p170 = por %p168, %p169
      %p171 = scmp.ne.s32.totalorder %s160, %s163
      %p172 = scmp.eq.s32.totalorder %s19, 1
      %p173 = por %p171, %p172
      %p174 = scmp.ne.s32.totalorder %s163, %s164
      %p175 = scmp.eq.s32.totalorder %s19, 0
      %p176 = por %p174, %p175
      %p177 = scmp.ne.s32.totalorder %s163, %s164
      %p178 = scmp.eq.s32.totalorder %s20, 1
      %p179 = por %p177, %p178
      %p181 = scmp.ne.s32.totalorder %s164, %s180
      %p182 = scmp.eq.s32.totalorder %s20, 0
      %p183 = por %p181, %p182
      %p184 = scmp.le.s32.totalorder 1, %s14
      %p185 = scmp.lt.s32.totalorder %s14, 3
      %p186 = pnand %p184, %p185
      %p187 = pneg %p186
      // Predicated region
      $region9: #{critic_forward_batched.1} parent=5 // pred_check
        _
      $region10: #{critic_forward_batched.1} parent=5 // pred_check_branch
        %189 = sbr.rel (%p186) target = $region12
      $region11: #{critic_forward_batched.1} parent=5 // pred_region
        %s190 = ssub.s32 %s14, 1
        // Predicated region
        $region13: #{critic_forward_batched.1} parent=11 // pred_check
          %p191 = pneg %p35
        $region14: #{critic_forward_batched.1} parent=11 // pred_check_branch
          %193 = sbr.rel (%p191) target = $region16
        $region15: #{critic_forward_batched.1} parent=11 // pred_region
          %195 = vsyncadd [#allocation4], 0
          %s197 = sshll.u32 %s0, 4
          %s198 = int_to_ptr.vmem [resolvable:$true] %s197
          %200 = dma.vmem_to_smem %s198, 16, [#allocation2], [#allocation4]
        $region16: #{critic_forward_batched.1} parent=11 // pred_fallthru
          _
        // Predicated region
        $region17: #{critic_forward_batched.1} parent=11 // pred_check
          %p201 = pneg %p108
        $region18: #{critic_forward_batched.1} parent=11 // pred_check_branch
          %203 = sbr.rel (%p201) target = $region20
        $region19: #{critic_forward_batched.1} parent=11 // pred_region
          _
        $region20: #{critic_forward_batched.1} parent=11 // pred_fallthru
          _
        // Predicated region
        $region21: #{critic_forward_batched.1} parent=11 // pred_check
          %p204 = pneg %p129
        $region22: #{critic_forward_batched.1} parent=11 // pred_check_branch
          %206 = sbr.rel (%p204) target = $region24
        $region23: #{critic_forward_batched.1} parent=11 // pred_region
          %208 = vsyncadd [#allocation3], 0
          %s209 = sshll.u32 %s4, 4
          %s210 = int_to_ptr.hbm [resolvable:$true] %s209
          %s211 = sshll.u32 [#allocation5], 4
          %s212 = int_to_ptr.vmem [resolvable:$true] %s211
          %217 = dma.hbm_to_vmem [thread:$0]  %s210, 2048, %s212, [#allocation3], 128, 128, 8
        $region24: #{critic_forward_batched.1} parent=11 // pred_fallthru
          _
        // Predicated region
        $region25: #{critic_forward_batched.1} parent=11 // pred_check
          %p218 = pneg %p150
        $region26: #{critic_forward_batched.1} parent=11 // pred_check_branch
          %220 = sbr.rel (%p218) target = $region28
        $region27: #{critic_forward_batched.1} parent=11 // pred_region
          _
        $region28: #{critic_forward_batched.1} parent=11 // pred_fallthru
          _
      $region12: #{critic_forward_batched.1} parent=5 // pred_fallthru
        _
      %p221 = scmp.lt.s32.totalorder %s14, 2
      // Predicated region
      $region29: #{critic_forward_batched.1} parent=5 // pred_check
        %p222 = pneg %p221
      $region30: #{critic_forward_batched.1} parent=5 // pred_check_branch
        %224 = sbr.rel (%p222) target = $region32
      $region31: #{critic_forward_batched.1} parent=5 // pred_region
        // Predicated region
        $region33: #{critic_forward_batched.1} parent=31 // pred_check
          %p225 = pneg %p55
        $region34: #{critic_forward_batched.1} parent=31 // pred_check_branch
          %227 = sbr.rel (%p225) target = $region36
        $region35: #{critic_forward_batched.1} parent=31 // pred_region
          %p228 = scmp.lt.s32.totalorder %s14, 1
          %s229 = scalar_select %p228, %s14, 1
          %s230 = smul.addr %s229, 8
          %s231 = scalar_lea.vmem %s1, %s230
        $region36: #{critic_forward_batched.1} parent=31 // pred_fallthru
          _
        // Predicated region
        $region37: #{critic_forward_batched.1} parent=31 // pred_check
          %p232 = pneg %p81
        $region38: #{critic_forward_batched.1} parent=31 // pred_check_branch
          %234 = sbr.rel (%p232) target = $region40
        $region39: #{critic_forward_batched.1} parent=31 // pred_region
          %p235 = scmp.lt.s32.totalorder %s14, 1
          %s236 = scalar_select %p235, %s14, 1
          %s237 = smul.addr %s236, 8
          %s238 = scalar_lea.vmem %s2, %s237
        $region40: #{critic_forward_batched.1} parent=31 // pred_fallthru
          _
      $region32: #{critic_forward_batched.1} parent=5 // pred_fallthru
        _
      %p239 = scmp.le.s32.totalorder 1, %s14
      %p240 = scmp.lt.s32.totalorder %s14, 3
      %p241 = pnand %p239, %p240
      %p242 = pneg %p241
      // Predicated region
      $region41: #{critic_forward_batched.1} parent=5 // pred_check
        _
      $region42: #{critic_forward_batched.1} parent=5 // pred_check_branch
        %244 = sbr.rel (%p241) target = $region44
      $region43: #{critic_forward_batched.1} parent=5 // pred_region
        %s245 = ssub.s32 %s14, 1
        // Predicated region
        $region45: #{critic_forward_batched.1} parent=43 // pred_check
          %p246 = pneg %p35
        $region46: #{critic_forward_batched.1} parent=43 // pred_check_branch
          %248 = sbr.rel (%p246) target = $region48
        $region47: #{critic_forward_batched.1} parent=43 // pred_region
          %250 = dma.done [#allocation4], 16
        $region48: #{critic_forward_batched.1} parent=43 // pred_fallthru
          _
        // Predicated region
        $region49: #{critic_forward_batched.1} parent=43 // pred_check
          %p251 = pneg %p129
        $region50: #{critic_forward_batched.1} parent=43 // pred_check_branch
          %253 = sbr.rel (%p251) target = $region52
        $region51: #{critic_forward_batched.1} parent=43 // pred_region
          %255 = dma.done [#allocation3], 2048
        $region52: #{critic_forward_batched.1} parent=43 // pred_fallthru
          _
        %256 = sfence
        %p257 = pneg %p35
        %p258 = pneg %p32
        %p259 = scmp.lt.s32.totalorder %s19, 1
        %s260 = scalar_select %p259, %s19, 1
        %s261 = smul.addr %s260, 8
        %s262 = scalar_lea.vmem %s1, %s261
        %p263 = pneg %p61
        %p264 = pneg %p58
        %p265 = scmp.lt.s32.totalorder %s19, 1
        %s266 = scalar_select %p265, %s19, 1
        %s267 = smul.addr %s266, 8
        %s268 = scalar_lea.vmem %s2, %s267
        %p269 = pneg %p87
        %p270 = pneg %p84
        %p271 = pneg %p108
        %p272 = pneg %p105
        %p273 = pneg %p129
        %p274 = pneg %p126
        %p275 = pneg %p150
        %p276 = pneg %p147
        %p277 = pneg %p176
        %p278 = pneg %p173
        %p279 = scmp.lt.s32.totalorder %s19, 1
        %s280 = scalar_select %p279, %s19, 1
        %s281 = smul.addr %s280, 8
        %s282 = scalar_lea.vmem %s6, %s281
        %p283 = scmp.lt.s32.totalorder %s19, 1
        %s284 = scalar_select %p283, %s19, 1
        %s285 = smul.addr %s284, 8
        %s286 = scalar_lea.vmem %s1, %s285
        %p287 = scmp.lt.s32.totalorder %s19, 1
        %s288 = scalar_select %p287, %s19, 1
        %s289 = smul.addr %s288, 8
        %s290 = scalar_lea.vmem %s2, %s289
        %p291 = scmp.lt.s32.totalorder %s19, 1
        %s292 = scalar_select %p291, %s19, 1
        %s293 = smul.addr %s292, 8
        %s294 = scalar_lea.vmem %s6, %s293
        %s295 = sld [smem:[#allocation2]]
        %s296 = sld [smem:[#allocation2 + $0x1]]
        %s297 = sld [smem:[#allocation2 + $0x2]]
        %s298 = sld [smem:[#allocation2 + $0x3]]
        %v299 = vld [vmem:[%s286] sm:$0xff]
        %v300 = vstv %s295
        %v301 = vmul.f32 %v300, %v299
        %v302 = vld [vmem:[%s290] sm:$0xff]
        %v303 = vstv %s296
        %v304 = vmul.f32 %v303, %v302
        %v305 = vadd.f32 %v301, %v304
        %v306 = vstv %s297
        %v307 = vadd.f32 %v305, %v306
        %v308 = vld [vmem:[%s3] sm:$0xff]
        %v309 = vld [vmem:[%s3 + $0x8] sm:$0xff]
        %v310 = vld [vmem:[%s3 + $0x10] sm:$0xff]
        %v311 = vld [vmem:[%s3 + $0x18] sm:$0xff]
        %v312 = vld [vmem:[%s3 + $0x20] sm:$0xff]
        %v313 = vld [vmem:[%s3 + $0x28] sm:$0xff]
        %v314 = vld [vmem:[%s3 + $0x30] sm:$0xff]
        %v315 = vld [vmem:[%s3 + $0x38] sm:$0xff]
        %v316 = vld [vmem:[%s3 + $0x40] sm:$0xff]
        %v317 = vld [vmem:[%s3 + $0x48] sm:$0xff]
        %v318 = vld [vmem:[%s3 + $0x50] sm:$0xff]
        %v319 = vld [vmem:[%s3 + $0x58] sm:$0xff]
        %v320 = vld [vmem:[%s3 + $0x60] sm:$0xff]
        %v321 = vld [vmem:[%s3 + $0x68] sm:$0xff]
        %v322 = vld [vmem:[%s3 + $0x70] sm:$0xff]
        %v323 = vld [vmem:[%s3 + $0x78] sm:$0xff]
        %324 = vmatpush.msra.mxu0 %v323
        %325 = vmatpush.msra.mxu0 %v322
        %326 = vmatpush.msra.mxu0 %v321
        %327 = vmatpush.msra.mxu0 %v320
        %328 = vmatpush.msra.mxu0 %v319
        %329 = vmatpush.msra.mxu0 %v318
        %330 = vmatpush.msra.mxu0 %v317
        %331 = vmatpush.msra.mxu0 %v316
        %332 = vmatpush.msra.mxu0 %v315
        %333 = vmatpush.msra.mxu0 %v314
        %334 = vmatpush.msra.mxu0 %v313
        %335 = vmatpush.msra.mxu0 %v312
        %336 = vmatpush.msra.mxu0 %v311
        %337 = vmatpush.msra.mxu0 %v310
        %338 = vmatpush.msra.mxu0 %v309
        %339 = vmatpush.msra.mxu0 %v308
        %340 = vmatmul.f32.gmra.mxu0 %v307
        %v341 = vpop.f32.mrf.mxu0
        %v342 = vadd.f32 0.0, %v341
        %343 = vdwg.mxu0
        %v344 = vmax.f32 %v342, 0.0
        %v345 = vld [vmem:[#allocation5] sm:$0xff]
        %v346 = vld [vmem:[#allocation5 + $0x8] sm:$0xff]
        %v347 = vld [vmem:[#allocation5 + $0x10] sm:$0xff]
        %v348 = vld [vmem:[#allocation5 + $0x18] sm:$0xff]
        %v349 = vld [vmem:[#allocation5 + $0x20] sm:$0xff]
        %v350 = vld [vmem:[#allocation5 + $0x28] sm:$0xff]
        %v351 = vld [vmem:[#allocation5 + $0x30] sm:$0xff]
        %v352 = vld [vmem:[#allocation5 + $0x38] sm:$0xff]
        %v353 = vld [vmem:[#allocation5 + $0x40] sm:$0xff]
        %v354 = vld [vmem:[#allocation5 + $0x48] sm:$0xff]
        %v355 = vld [vmem:[#allocation5 + $0x50] sm:$0xff]
        %v356 = vld [vmem:[#allocation5 + $0x58] sm:$0xff]
        %v357 = vld [vmem:[#allocation5 + $0x60] sm:$0xff]
        %v358 = vld [vmem:[#allocation5 + $0x68] sm:$0xff]
        %v359 = vld [vmem:[#allocation5 + $0x70] sm:$0xff]
        %v360 = vld [vmem:[#allocation5 + $0x78] sm:$0xff]
        %361 = vmatpush.msra.mxu0 %v360
        %362 = vmatpush.msra.mxu0 %v359
        %363 = vmatpush.msra.mxu0 %v358
        %364 = vmatpush.msra.mxu0 %v357
        %365 = vmatpush.msra.mxu0 %v356
        %366 = vmatpush.msra.mxu0 %v355
        %367 = vmatpush.msra.mxu0 %v354
        %368 = vmatpush.msra.mxu0 %v353
        %369 = vmatpush.msra.mxu0 %v352
        %370 = vmatpush.msra.mxu0 %v351
        %371 = vmatpush.msra.mxu0 %v350
        %372 = vmatpush.msra.mxu0 %v349
        %373 = vmatpush.msra.mxu0 %v348
        %374 = vmatpush.msra.mxu0 %v347
        %375 = vmatpush.msra.mxu0 %v346
        %376 = vmatpush.msra.mxu0 %v345
        %377 = vmatmul.f32.gmra.mxu0 %v344
        %v378 = vpop.f32.mrf.mxu0
        %v379 = vadd.f32 0.0, %v378
        %380 = vdwg.mxu0
        %v381 = vmax.f32 %v379, 0.0
        %v382 = vld [vmem:[%s5] sm:$0x1]
        %v384 = vperm.slane %v382, 0
        %v386 = vmul.f32 %v381, %v384
        %387 = vadd.xlane.f32.xlu0 %v386
        %v388 = vpop.xlane.xlu0 %387
        %v389 = vstv %s298
        %v390 = vadd.f32 %v388, %v389
        %vm391 = vcmask 7168
        %392 = vst.msk [vmem:[%s294] sm:$0xff] %vm391, %v390
        %p393 = scmp.lt.s32.totalorder %s19, 1
        %s394 = scalar_select %p393, %s19, 1
        %s395 = smul.addr %s394, 8
        %s396 = scalar_lea.vmem %s6, %s395
        // Predicated region
        $region53: #{critic_forward_batched.1} parent=43 // pred_check
          %p397 = pneg %p173
        $region54: #{critic_forward_batched.1} parent=43 // pred_check_branch
          %399 = sbr.rel (%p397) target = $region56
        $region55: #{critic_forward_batched.1} parent=43 // pred_region
          _
        $region56: #{critic_forward_batched.1} parent=43 // pred_fallthru
          _
      $region44: #{critic_forward_batched.1} parent=5 // pred_fallthru
        _
      %p400 = scmp.le.s32.totalorder 2, %s14
      // Predicated region
      $region57: #{critic_forward_batched.1} parent=5 // pred_check
        %p401 = pneg %p400
      $region58: #{critic_forward_batched.1} parent=5 // pred_check_branch
        %403 = sbr.rel (%p401) target = $region60
      $region59: #{critic_forward_batched.1} parent=5 // pred_region
        %s404 = ssub.s32 %s14, 2
        // Predicated region
        $region61: #{critic_forward_batched.1} parent=59 // pred_check
          %p405 = pneg %p179
        $region62: #{critic_forward_batched.1} parent=59 // pred_check_branch
          %407 = sbr.rel (%p405) target = $region64
        $region63: #{critic_forward_batched.1} parent=59 // pred_region
          %p408 = scmp.lt.s32.totalorder %s20, 1
          %s409 = scalar_select %p408, %s20, 1
          %s410 = smul.addr %s409, 8
          %s411 = scalar_lea.vmem %s6, %s410
        $region64: #{critic_forward_batched.1} parent=59 // pred_fallthru
          _
      $region60: #{critic_forward_batched.1} parent=5 // pred_fallthru
        _
    $region6: #{critic_forward_batched.1} parent=1 // loop_footer
      %s18 = sadd.s32 1, %s14
    $region7: #{critic_forward_batched.1} parent=1 // loop_footer_branch
      %13 = sbr.rel target = $region3
    $region8: #{critic_forward_batched.1} parent=1 // loop_exit
      _
    %412 = vsyncpa [#allocation3], 1
    %s413 = scalar_lea.sflag [#allocation3], 1
    %414 = vsyncpa %s413, 1
    %415 = vsyncpa [#allocation4], 1
    %s416 = scalar_lea.sflag [#allocation4], 1
    %417 = vsyncpa %s416, 1

</llo_original>
